<compile_context>
chip_gen: v6e
topology: v6e:2x2x1
jax: 0.10.0
libtpu: 0.0.40
codegen_flags: <defaults>
</compile_context>

<pallas_src>
import jax
import jax.numpy as jnp
from jax import lax
from jax.experimental import pallas as pl
from jax.experimental.pallas import tpu as pltpu

_LANE = 128
_SUBLANE = 8


def _cdiv(a, b):
    return -(-a // b)


def _round_up(n, m):
    return ((n + m - 1) // m) * m


def _make_input_spec(block_shape, index_map, buffers):
    if buffers > 2:
        try:
            return pl.BlockSpec(block_shape, index_map,
                                pipeline_mode=pl.Buffered(buffers))
        except Exception:  # older jax without pipeline_mode / Buffered
            pass
    return pl.BlockSpec(block_shape, index_map)


def l_color(x, *, target_rows_per_chunk=2048, block_budget_bytes=4 << 20):
    """Zero-DCE L_color.  x: (b, 3, h, w), any float dtype.  Returns (b,1,1,1) f32."""
    b, c, h, w = x.shape
    assert c == 3, "L_color expects 3 channels (RGB)"
    hw = h * w
    inv_hw = 1.0 / float(hw)                      # divide by the *true* pixel count

    # ---- lane-dense layout: each channel plane -> (rows8, 128) -------------
    rows = _cdiv(hw, _LANE)
    rows8 = _round_up(rows, _SUBLANE)

    x_flat = x.reshape(b, c, hw)
    pad = rows8 * _LANE - hw
    if pad:
        # Exact zero-pad (only when hw % (8*128) != 0, i.e. unusual sizes); the
        # padded tail contributes 0 to the raw sums.
        x_flat = jnp.pad(x_flat, ((0, 0), (0, 0), (0, pad)))
    x_tiled = x_flat.reshape(b, c, rows8, _LANE)

    # ---- chunking without the round_up(rows, TR) overshoot ------------------
    target = max(_SUBLANE, _round_up(int(target_rows_per_chunk), _SUBLANE))
    num_chunks = _cdiv(rows8, target)
    tr = _round_up(_cdiv(rows8, num_chunks), _SUBLANE)
    num_chunks = _cdiv(rows8, tr)                 # guarantees 0 < tail_rows <= tr
    tail_rows = rows8 - (num_chunks - 1) * tr     # valid rows in the last chunk
    ragged = tail_rows != tr                      # static python bool

    # ---- fold small batch elements per grid step ----------------------------
    per_image_chunk_bytes = c * tr * _LANE * x.dtype.itemsize
    b_tile = 1
    for cand in (8, 4, 2):
        if (b % cand == 0 and b // cand >= 2
                and cand * per_image_chunk_bytes <= block_budget_bytes):
            b_tile = cand
            break

    buffers = 3 if num_chunks > 2 else 2

    def kernel(x_ref, o_ref, acc_ref):
        k_id = pl.program_id(1)
        last = pl.num_programs(1) - 1

        @pl.when(k_id == 0)
        def _():
            acc_ref[...] = jnp.zeros_like(acc_ref)

        x_blk = x_ref[...]                        # (bt, 3, tr, 128) native dtype
        if ragged:
            # Ragged last chunk: the block extends past rows8; select-mask the
            # out-of-range rows so uninitialized DMA data cannot leak in.
            valid = rows8 - k_id * tr             # >= tr for all but the last chunk
            row = lax.broadcasted_iota(jnp.int32, (tr, _LANE), 0)
            keep = (row < valid)[None, None, :, :]
            x_blk = jnp.where(keep, x_blk, jnp.array(0, dtype=x_blk.dtype))

        # Per-chunk: reduce over the sublane (row) axis only, with the upcast
        # fused into the reduction (no materialized f32 copy of the block).
        # (A (bt,3,8,128) sublane-preserving accumulator would shave the
        #  per-chunk XLU step, but it is hidden under DMA here.)
        acc_ref[...] += jnp.sum(x_blk, axis=2, dtype=jnp.float32)

        @pl.when(k_id == last)
        def _():
            # Single cross-lane reduce + scalar math, once per batch group.
            total = jnp.sum(acc_ref[...], axis=-1, keepdims=True)   # (bt, 3, 1)
            mean = total * inv_hw
            mr = mean[:, 0:1, :]
            mg = mean[:, 1:2, :]
            mb = mean[:, 2:3, :]
            drg = (mr - mg) ** 2
            drb = (mr - mb) ** 2
            dgb = (mb - mg) ** 2
            kval = jnp.sqrt(drg * drg + drb * drb + dgb * dgb)      # (bt, 1, 1)
            o_ref[...] = kval.astype(o_ref.dtype)

    out = pl.pallas_call(
        kernel,
        out_shape=jax.ShapeDtypeStruct((b, 1, 1), jnp.float32),
        grid_spec=pltpu.PrefetchScalarGridSpec(
            num_scalar_prefetch=0,
            grid=(b // b_tile, num_chunks),
            in_specs=[
                _make_input_spec((b_tile, c, tr, _LANE),
                                 lambda i, k: (i, 0, k, 0), buffers),
            ],
            out_specs=pl.BlockSpec((b_tile, 1, 1), lambda i, k: (i, 0, 0)),
            scratch_shapes=[pltpu.VMEM((b_tile, c, _LANE), jnp.float32)],
        ),
        compiler_params=pltpu.CompilerParams(
            dimension_semantics=("parallel", "arbitrary"),
        ),
    )(x_tiled)

    return out.reshape(b, 1, 1, 1)


def _l_color_ref(x):
    mean_rgb = jnp.mean(x.astype(jnp.float32), axis=(2, 3), keepdims=True)
    mr, mg, mb = mean_rgb[:, 0:1], mean_rgb[:, 1:2], mean_rgb[:, 2:3]
    drg = (mr - mg) ** 2
    drb = (mr - mb) ** 2
    dgb = (mb - mg) ** 2
    return jnp.sqrt(drg ** 2 + drb ** 2 + dgb ** 2)


if __name__ == "__main__":
    key = jax.random.PRNGKey(0)
    k1, k2, k3 = jax.random.split(key, 3)

    # Case 1: small spatial size (needs the small zero-pad path), no batch fold.
    x1 = jax.random.uniform(k1, (2, 3, 16, 16), dtype=jnp.float32)
    o1 = jax.block_until_ready(l_color(x1))
    assert o1.shape == (2, 1, 1, 1)
    assert jnp.allclose(o1, _l_color_ref(x1), atol=1e-5, rtol=1e-5)

    # Case 2: multi-chunk reduction with a ragged last chunk (in-kernel row
    # mask) and 3-deep input buffering: 68x68 -> rows8=40, TR=16, 3 chunks.
    x2 = jax.random.uniform(k2, (2, 3, 68, 68), dtype=jnp.float32)
    o2 = jax.block_until_ready(l_color(x2, target_rows_per_chunk=16))
    assert jnp.allclose(o2, _l_color_ref(x2), atol=1e-5, rtol=1e-5)

    # Case 3: batch folding (b=4 -> B_TILE=2), no wrapper pad (hw % 1024 == 0).
    x3 = jax.random.uniform(k3, (4, 3, 32, 32), dtype=jnp.float32)
    o3 = jax.block_until_ready(l_color(x3))
    assert o3.shape == (4, 1, 1, 1)
    assert jnp.allclose(o3, _l_color_ref(x3), atol=1e-5, rtol=1e-5)

    # Case 4: native bf16 input streamed without a wrapper-side f32 cast.
    x4 = x1.astype(jnp.bfloat16)
    o4 = jax.block_until_ready(l_color(x4))
    assert jnp.allclose(o4, _l_color_ref(x4), atol=1e-6, rtol=1e-3)

    print("KERNEL_OK")
</pallas_src>

<mosaic_0001>
module attributes {stable_mosaic.version = 11 : i64} {
  func.func @kernel(%arg0: i32, %arg1: i32, %arg2: memref<1x3x8x128xf32, #tpu.memory_space<vmem>>, %arg3: memref<1x1x1xf32, #tpu.memory_space<vmem>>, %arg4: memref<1x3x128xf32, #tpu.memory_space<vmem>>) attributes {dimension_semantics = [#tpu.dimension_semantics<parallel>, #tpu.dimension_semantics<arbitrary>], iteration_bounds = array<i64: 2, 1>, scalar_prefetch = 0 : i64, scratch_operands = 1 : i64, tpu.core_type = #tpu.core_type<tc>, window_params = [{transform_indices = @transform_0, window_bounds = array<i64: 1, 3, 8, 128>}, {transform_indices = @transform_1, window_bounds = array<i64: 1, 1, 1>}]} {
    %c0_i32 = arith.constant 0 : i32
    %0 = arith.cmpi eq, %arg1, %c0_i32 : i32
    %1 = arith.extui %0 : i1 to i32
    %c0_i32_0 = arith.constant 0 : i32
    %2 = arith.cmpi ne, %1, %c0_i32_0 : i32
    scf.if %2 {
      %cst_12 = arith.constant 0.000000e+00 : f32
      %11 = vector.broadcast %cst_12 : f32 to vector<1x3x128xf32>
      %c0_13 = arith.constant 0 : index
      %c0_14 = arith.constant 0 : index
      %c0_15 = arith.constant 0 : index
      %12 = vector.load %arg4[%c0_13, %c0_14, %c0_15] : memref<1x3x128xf32, #tpu.memory_space<vmem>>, vector<1x3x128xf32>
      tpu.vector_store %arg4[%c0_13, %c0_14, %c0_15], %11 {strides = array<i32>} : memref<1x3x128xf32, #tpu.memory_space<vmem>>, vector<1x3x128xf32>,
    } else {
    }
    %c0 = arith.constant 0 : index
    %c0_1 = arith.constant 0 : index
    %c0_2 = arith.constant 0 : index
    %c0_3 = arith.constant 0 : index
    %3 = vector.load %arg2[%c0, %c0_1, %c0_2, %c0_3] : memref<1x3x8x128xf32, #tpu.memory_space<vmem>>, vector<1x3x8x128xf32>
    %c0_4 = arith.constant 0 : index
    %c0_5 = arith.constant 0 : index
    %c0_6 = arith.constant 0 : index
    %4 = vector.load %arg4[%c0_4, %c0_5, %c0_6] : memref<1x3x128xf32, #tpu.memory_space<vmem>>, vector<1x3x128xf32>
    %cst = arith.constant dense<0.000000e+00> : vector<1x3x128xf32>
    %5 = vector.multi_reduction <add>, %3, %cst [2] : vector<1x3x8x128xf32> to vector<1x3x128xf32>
    %6 = arith.addf %4, %5 : vector<1x3x128xf32>
    %c0_7 = arith.constant 0 : index
    %c0_8 = arith.constant 0 : index
    %c0_9 = arith.constant 0 : index
    %7 = vector.load %arg4[%c0_7, %c0_8, %c0_9] : memref<1x3x128xf32, #tpu.memory_space<vmem>>, vector<1x3x128xf32>
    tpu.vector_store %arg4[%c0_7, %c0_8, %c0_9], %6 {strides = array<i32>} : memref<1x3x128xf32, #tpu.memory_space<vmem>>, vector<1x3x128xf32>,
    %c0_i32_10 = arith.constant 0 : i32
    %8 = arith.cmpi eq, %arg1, %c0_i32_10 : i32
    %9 = arith.extui %8 : i1 to i32
    %c0_i32_11 = arith.constant 0 : i32
    %10 = arith.cmpi ne, %9, %c0_i32_11 : i32
    scf.if %10 {
      %c0_12 = arith.constant 0 : index
      %c0_13 = arith.constant 0 : index
      %c0_14 = arith.constant 0 : index
      %11 = vector.load %arg4[%c0_12, %c0_13, %c0_14] : memref<1x3x128xf32, #tpu.memory_space<vmem>>, vector<1x3x128xf32>
      %cst_15 = arith.constant dense<0.000000e+00> : vector<1x3xf32>
      %12 = vector.multi_reduction <add>, %11, %cst_15 [2] : vector<1x3x128xf32> to vector<1x3xf32>
      %13 = vector.shape_cast %12 : vector<1x3xf32> to vector<1x3x1xf32>
      %cst_16 = arith.constant 3.906250e-03 : f32
      %14 = vector.broadcast %cst_16 : f32 to vector<1x3x1xf32>
      %15 = arith.mulf %13, %14 : vector<1x3x1xf32>
      %16 = vector.extract_strided_slice %15 {offsets = [0, 0, 0], sizes = [1, 1, 1], strides = [1, 1, 1]} : vector<1x3x1xf32> to vector<1x1x1xf32>
      %17 = vector.extract_strided_slice %15 {offsets = [0, 1, 0], sizes = [1, 1, 1], strides = [1, 1, 1]} : vector<1x3x1xf32> to vector<1x1x1xf32>
      %18 = vector.extract_strided_slice %15 {offsets = [0, 2, 0], sizes = [1, 1, 1], strides = [1, 1, 1]} : vector<1x3x1xf32> to vector<1x1x1xf32>
      %19 = arith.subf %16, %17 : vector<1x1x1xf32>
      %20 = arith.mulf %19, %19 : vector<1x1x1xf32>
      %21 = arith.subf %16, %18 : vector<1x1x1xf32>
      %22 = arith.mulf %21, %21 : vector<1x1x1xf32>
      %23 = arith.subf %18, %17 : vector<1x1x1xf32>
      %24 = arith.mulf %23, %23 : vector<1x1x1xf32>
      %25 = arith.mulf %20, %20 : vector<1x1x1xf32>
      %26 = arith.mulf %22, %22 : vector<1x1x1xf32>
      %27 = arith.addf %25, %26 : vector<1x1x1xf32>
      %28 = arith.mulf %24, %24 : vector<1x1x1xf32>
      %29 = arith.addf %27, %28 : vector<1x1x1xf32>
      %30 = math.sqrt %29 : vector<1x1x1xf32>
      %c0_17 = arith.constant 0 : index
      %c0_18 = arith.constant 0 : index
      %c0_19 = arith.constant 0 : index
      %31 = vector.load %arg3[%c0_17, %c0_18, %c0_19] : memref<1x1x1xf32, #tpu.memory_space<vmem>>, vector<1x1x1xf32>
      tpu.vector_store %arg3[%c0_17, %c0_18, %c0_19], %30 {strides = array<i32>} : memref<1x1x1xf32, #tpu.memory_space<vmem>>, vector<1x1x1xf32>,
    } else {
    }
    return
  }
  func.func @transform_0(%arg0: i32, %arg1: i32) -> (i32, i32, i32, i32) {
    %c0_i32 = arith.constant 0 : i32
    %c0_i32_0 = arith.constant 0 : i32
    %c0_i32_1 = arith.constant 0 : i32
    return %arg0, %c0_i32, %arg1, %c0_i32_0 : i32, i32, i32, i32
  }
  func.func @transform_1(%arg0: i32, %arg1: i32) -> (i32, i32, i32) {
    %c0_i32 = arith.constant 0 : i32
    %c0_i32_0 = arith.constant 0 : i32
    %c0_i32_1 = arith.constant 0 : i32
    return %arg0, %c0_i32, %c0_i32_0 : i32, i32, i32
  }
}

</mosaic_0001>

<llo_original>
// kernel: tpu_custom_call.1
$region0: #{tpu_custom_call.1}
  #allocation0 [shape = 'u32[]', space=smem, size = 0x4, offset = 0x4, fixed_abs, tag = 'smem constant byte address 0x4 - core index']
  #allocation1 [shape = 'u32[144,128]{1,0:T(1,128)}', space=vmem, size = 0x12000, scoped, tag = 'internal scratch']
  #allocation2 [shape = 'f32[1,3,128]{2,1,0:T(4,128)}', space=vmem, size = 0x800, scoped, tag = 'scratch operand']
  %s0 = inlined_call_operand.hbm [shape: f32[2,3,8,128], index: 0, kind: input, shape index: {}]
  %s1 = inlined_call_operand.vmem [shape: f32[2,1,1], index: 1, kind: output, shape index: {}]
  %s2 = sld [smem:[#allocation0]]
  $region49: #{tpu_custom_call.1} parent=0
    _
  %s4 = ssub.s32 1, %s2
  %s5 = scalar_select 0, %s4, %s2
  $region1: #{tpu_custom_call.1} parent=0
    #allocation3 [shape = 'u8[24576]{0}', space=vmem, size = 0x6000, scoped, tag = 'input window, operand 0']
    #allocation4 [shape = 's32[2]{0}', space=sflag, size = 0x8, scoped, tag = 'scoped memory for tpu_custom_call.1']
    %6 = vsyncpa [#allocation4], 0
    %s7 = scalar_lea.sflag [#allocation4], 1
    %8 = vsyncpa %s7, 0
    loop: start=0, step=1, limit=4
    $region2: #{tpu_custom_call.1} parent=1 // loop_pre_header
      _
    $region3: #{tpu_custom_call.1} parent=1 // loop_header
      %s10 = sphi 0, %s14
      %p11 = scmp.ge.s32.totalorder %s10, 4
      %s17 = sphi 0, %s29
      %s18 = sphi 0, %s25
      %s19 = sphi 0, %s17
      %s20 = sphi 0, %s18
      %s21 = sphi 0, %s19
      %s22 = sphi 0, %s20
      %s34 = sphi 0, %s36
      %s37 = sphi 0, %s34
      %s38 = sphi 0, %s37
      %s54 = sphi 0, %s38
      %s60 = sphi 0, %s62
      %s63 = sphi 0, %s60
      %s64 = sphi 0, %s63
      %s80 = sphi 0, %s64
    $region4: #{tpu_custom_call.1} parent=1 // loop_header_branch
      %13 = sbr.rel (%p11) target = $region8
    $region5: #{tpu_custom_call.1} parent=1 // loop_body
      %s15 = ssub.s32 %s10, 1
      %s16 = ssub.s32 %s10, 2
      %s23 = sadd.s32 1, %s18
      %p24 = scmp.ge.s32.totalorder %s23, 1
      %s25 = scalar_select %p24, 0, %s23
      %s26 = sadd.s32 1, %s17
      %s27 = scalar_select %p24, %s26, %s17
      %p28 = scmp.ge.s32.totalorder %s27, 2
      %s29 = scalar_select %p28, 0, %s27
      %s30 = ssub.s32 %s17, %s29
      %s31 = ssub.s32 %s18, %s25
      %s32 = sor.u32 %s30, %s31
      %p33 = scmp.eq.s32.totalorder %s32, 0
      %s35 = sadd.s32 %s34, 1
      %s36 = scalar_select %p33, %s34, %s35
      %p39 = pneg %p33
      %p40 = scmp.eq.s32.totalorder %s10, 1
      %p41 = por %p39, %p40
      %p42 = scmp.ne.s32.totalorder %s34, %s37
      %p43 = scmp.eq.s32.totalorder %s10, 0
      %p44 = por %p42, %p43
      %p45 = scmp.ne.s32.totalorder %s34, %s37
      %p46 = scmp.eq.s32.totalorder %s15, 1
      %p47 = por %p45, %p46
      %p48 = scmp.ne.s32.totalorder %s37, %s38
      %p49 = scmp.eq.s32.totalorder %s15, 0
      %p50 = por %p48, %p49
      %p51 = scmp.ne.s32.totalorder %s37, %s38
      %p52 = scmp.eq.s32.totalorder %s16, 1
      %p53 = por %p51, %p52
      %p55 = scmp.ne.s32.totalorder %s38, %s54
      %p56 = scmp.eq.s32.totalorder %s16, 0
      %p57 = por %p55, %p56
      %s58 = ssub.s32 %s17, %s29
      %p59 = scmp.eq.s32.totalorder %s58, 0
      %s61 = sadd.s32 %s60, 1
      %s62 = scalar_select %p59, %s60, %s61
      %p65 = pneg %p59
      %p66 = scmp.eq.s32.totalorder %s10, 1
      %p67 = por %p65, %p66
      %p68 = scmp.ne.s32.totalorder %s60, %s63
      %p69 = scmp.eq.s32.totalorder %s10, 0
      %p70 = por %p68, %p69
      %p71 = scmp.ne.s32.totalorder %s60, %s63
      %p72 = scmp.eq.s32.totalorder %s15, 1
      %p73 = por %p71, %p72
      %p74 = scmp.ne.s32.totalorder %s63, %s64
      %p75 = scmp.eq.s32.totalorder %s15, 0
      %p76 = por %p74, %p75
      %p77 = scmp.ne.s32.totalorder %s63, %s64
      %p78 = scmp.eq.s32.totalorder %s16, 1
      %p79 = por %p77, %p78
      %p81 = scmp.ne.s32.totalorder %s64, %s80
      %p82 = scmp.eq.s32.totalorder %s16, 0
      %p83 = por %p81, %p82
      %p84 = scmp.le.s32.totalorder 1, %s10
      %p85 = scmp.lt.s32.totalorder %s10, 3
      %p86 = pnand %p84, %p85
      %p87 = pneg %p86
      // Predicated region
      $region9: #{tpu_custom_call.1} parent=5 // pred_check
        _
      $region10: #{tpu_custom_call.1} parent=5 // pred_check_branch
        %89 = sbr.rel (%p86) target = $region12
      $region11: #{tpu_custom_call.1} parent=5 // pred_region
        %s90 = ssub.s32 %s10, 1
      $region12: #{tpu_custom_call.1} parent=5 // pred_fallthru
        _
      %p91 = scmp.lt.s32.totalorder %s10, 2
      // Predicated region
      $region13: #{tpu_custom_call.1} parent=5 // pred_check
        %p92 = pneg %p91
      $region14: #{tpu_custom_call.1} parent=5 // pred_check_branch
        %94 = sbr.rel (%p92) target = $region16
      $region15: #{tpu_custom_call.1} parent=5 // pred_region
        // Predicated region
        $region17: #{tpu_custom_call.1} parent=15 // pred_check
          %p95 = pneg %p44
        $region18: #{tpu_custom_call.1} parent=15 // pred_check_branch
          %97 = sbr.rel (%p95) target = $region20
        $region19: #{tpu_custom_call.1} parent=15 // pred_region
          %s98 = sand.u32 %s34, 1
          %s99 = scalar_lea.sflag [#allocation4], %s98
          %s100 = sand.u32 %s34, 1
          %s101 = smul.addr %s100, 24
          %s102 = scalar_lea.vmem [#allocation3], %s101
          %s104 = ssub.s32 384, 384
          %105 = vsyncadd %s99, %s104
          %s106 = smul.addr %s17, 3
          %s107 = sadd.s32 %s18, %s106
          %s108 = smul.addr %s107, 128
          %s109 = scalar_lea.hbm %s0, %s108
          %s110 = sshll.u32 %s102, 4
          %s111 = int_to_ptr.vmem [resolvable:$true] %s110
          %116 = dma.hbm_to_vmem [thread:$0]  %s109, 384, %s111, %s99, 128, 128, 8
        $region20: #{tpu_custom_call.1} parent=15 // pred_fallthru
          _
      $region16: #{tpu_custom_call.1} parent=5 // pred_fallthru
        _
      %p117 = scmp.le.s32.totalorder 1, %s10
      %p118 = scmp.lt.s32.totalorder %s10, 3
      %p119 = pnand %p117, %p118
      %p120 = pneg %p119
      // Predicated region
      $region21: #{tpu_custom_call.1} parent=5 // pred_check
        _
      $region22: #{tpu_custom_call.1} parent=5 // pred_check_branch
        %122 = sbr.rel (%p119) target = $region24
      $region23: #{tpu_custom_call.1} parent=5 // pred_region
        %s123 = ssub.s32 %s10, 1
        %s124 = sand.u32 %s37, 1
        %s125 = scalar_lea.sflag [#allocation4], %s124
        %s126 = sand.u32 %s37, 1
        %s127 = smul.addr %s126, 24
        %s128 = scalar_lea.vmem [#allocation3], %s127
        // Predicated region
        $region25: #{tpu_custom_call.1} parent=23 // pred_check
          %p129 = pneg %p50
        $region26: #{tpu_custom_call.1} parent=23 // pred_check_branch
          %131 = sbr.rel (%p129) target = $region28
        $region27: #{tpu_custom_call.1} parent=23 // pred_region
          %132 = dma.done %s125, 384
        $region28: #{tpu_custom_call.1} parent=23 // pred_fallthru
          _
        %s133 = sand.u32 %s37, 1
        %s134 = scalar_lea.sflag [#allocation4], %s133
        %s135 = sand.u32 %s37, 1
        %s136 = smul.addr %s135, 24
        %s137 = scalar_lea.vmem [#allocation3], %s136
        %p138 = pneg %p50
        %p139 = pneg %p47
        %p140 = pneg %p76
        %p141 = pneg %p73
        %p142 = scmp.lt.s32.totalorder %s19, 1
        %s143 = scalar_select %p142, %s19, 1
        %s144 = scalar_lea.vmem %s1, %s143
        %p145 = scmp.lt.s32.totalorder %s19, 1
        %s146 = scalar_select %p145, %s19, 1
        %s147 = scalar_lea.vmem %s1, %s146
        %p148 = scmp.eq.s32.totalorder %s20, 0
        // Predicated region
        $region29: #{tpu_custom_call.1} parent=23 // pred_check
          %p149 = pneg %p148
        $region30: #{tpu_custom_call.1} parent=23 // pred_check_branch
          %151 = sbr.rel (%p149) target = $region32
        $region31: #{tpu_custom_call.1} parent=23 // pred_region
          %152 = vst [vmem:[#allocation2] sm:$0x7] 0.0
        $region32: #{tpu_custom_call.1} parent=23 // pred_fallthru
          _
        %v153 = vld [vmem:[%s128] sm:$0xff]
        %v154 = vld [vmem:[%s128 + $0x8] sm:$0xff]
        %v155 = vld [vmem:[%s128 + $0x10] sm:$0xff]
        %v156 = vld [vmem:[#allocation2] sm:$0x7]
        %v157 = vrot.slane %v153, 4
        %v158 = vadd.f32 %v153, %v157
        %v159 = vrot.slane %v158, 2
        %v160 = vadd.f32 %v158, %v159
        %v161 = vrot.slane %v160, 1
        %v162 = vadd.f32 %v160, %v161
        %v163 = vrot.slane %v154, 4
        %v164 = vadd.f32 %v154, %v163
        %v165 = vrot.slane %v164, 2
        %v166 = vadd.f32 %v164, %v165
        %v167 = vrot.slane %v166, 1
        %v168 = vadd.f32 %v166, %v167
        %v169 = vrot.slane %v155, 4
        %v170 = vadd.f32 %v155, %v169
        %v171 = vrot.slane %v170, 2
        %v172 = vadd.f32 %v170, %v171
        %v173 = vrot.slane %v172, 1
        %v174 = vadd.f32 %v172, %v173
        %vm178 = vcmask 1041409
        %v179 = vsel %vm178, %v168, %v162
        %vm180 = vcmask 1042434
        %v181 = vsel %vm180, %v174, %v179
        %v183 = vadd.f32 %v156, %v181
        %184 = vst [vmem:[#allocation2] sm:$0x7] %v183
        // Predicated region
        $region33: #{tpu_custom_call.1} parent=23 // pred_check
          %p185 = pneg %p148
        $region34: #{tpu_custom_call.1} parent=23 // pred_check_branch
          %187 = sbr.rel (%p185) target = $region36
        $region35: #{tpu_custom_call.1} parent=23 // pred_region
          %v188 = vld [vmem:[#allocation2] sm:$0x7]
          %vm189 = vcmask 1042432
          %v190 = vsel %vm189, %v188, 0.0
          %191 = vadd.xlane.f32.xlu0 %v190
          %v192 = vpop.xlane.xlu0 %191
          %v193 = vmul.f32 %v192, 0.00390625
          %v195 = vrot.slane %v193, 1
          %v197 = vsub.f32 %v193, %v195
          %v198 = vmul.f32 %v197, %v197
          %v199 = vrot.slane %v193, 2
          %v201 = vsub.f32 %v193, %v199
          %v202 = vmul.f32 %v201, %v201
          %v203 = vrot.slane %v193, 7
          %v205 = vsub.f32 %v193, %v203
          %v206 = vmul.f32 %v205, %v205
          %v207 = vmul.f32 %v198, %v198
          %v208 = vmul.f32 %v202, %v202
          %v209 = vadd.f32 %v207, %v208
          %v210 = vmul.f32 %v206, %v206
          %v212 = vrot.slane %v210, 2
          %v214 = vadd.f32 %v209, %v212
          %v215 = vrsqrt.pop %v214
          %v216 = vmul.f32 %v214, %v215
          %vm217 = vcmp.eq.f32.partialorder %v214, inf
          %v218 = vsel %vm217, %v214, %v216
          %vm219 = vcmp.eq.f32.partialorder %v214, 0.0
          %v220 = vand.u32 %v214, 2147483648
          %v221 = vsel %vm219, %v220, %v218
          %vm222 = vcmask 0
          %223 = vst.msk [vmem:[%s147] sm:$0x1] %vm222, %v221
        $region36: #{tpu_custom_call.1} parent=23 // pred_fallthru
          _
        %p224 = scmp.lt.s32.totalorder %s19, 1
        %s225 = scalar_select %p224, %s19, 1
        %s226 = scalar_lea.vmem %s1, %s225
        // Predicated region
        $region37: #{tpu_custom_call.1} parent=23 // pred_check
          %p227 = pneg %p73
        $region38: #{tpu_custom_call.1} parent=23 // pred_check_branch
          %229 = sbr.rel (%p227) target = $region40
        $region39: #{tpu_custom_call.1} parent=23 // pred_region
          _
        $region40: #{tpu_custom_call.1} parent=23 // pred_fallthru
          _
      $region24: #{tpu_custom_call.1} parent=5 // pred_fallthru
        _
      %p230 = scmp.le.s32.totalorder 2, %s10
      // Predicated region
      $region41: #{tpu_custom_call.1} parent=5 // pred_check
        %p231 = pneg %p230
      $region42: #{tpu_custom_call.1} parent=5 // pred_check_branch
        %233 = sbr.rel (%p231) target = $region44
      $region43: #{tpu_custom_call.1} parent=5 // pred_region
        %s234 = ssub.s32 %s10, 2
        // Predicated region
        $region45: #{tpu_custom_call.1} parent=43 // pred_check
          %p235 = pneg %p79
        $region46: #{tpu_custom_call.1} parent=43 // pred_check_branch
          %237 = sbr.rel (%p235) target = $region48
        $region47: #{tpu_custom_call.1} parent=43 // pred_region
          %p238 = scmp.lt.s32.totalorder %s21, 1
          %s239 = scalar_select %p238, %s21, 1
          %s240 = scalar_lea.vmem %s1, %s239
        $region48: #{tpu_custom_call.1} parent=43 // pred_fallthru
          _
      $region44: #{tpu_custom_call.1} parent=5 // pred_fallthru
        _
    $region6: #{tpu_custom_call.1} parent=1 // loop_footer
      %s14 = sadd.s32 1, %s10
    $region7: #{tpu_custom_call.1} parent=1 // loop_footer_branch
      %9 = sbr.rel target = $region3
    $region8: #{tpu_custom_call.1} parent=1 // loop_exit
      _
    %241 = vsyncpa [#allocation4], 1
    %s242 = scalar_lea.sflag [#allocation4], 1
    %243 = vsyncpa %s242, 1

</llo_original>
